<compile_context>
chip_gen: v6e
topology: v6e:2x2x1
jax: 0.10.0
libtpu: 0.0.40
codegen_flags: <defaults>
</compile_context>

<pallas_src>
import jax
import jax.numpy as jnp
from jax.experimental import pallas as pl
from jax.experimental.pallas import tpu as pltpu


def _round_up(x: int, m: int) -> int:
    return ((x + m - 1) // m) * m


def _support_kernel(x_ref, w_ref, s_ref):
    # support tile = x_tile @ W  (f32 accumulate on the MXU), stored bf16 so
    # the big adj @ support matmul streams half the bytes.
    s_ref[...] = jnp.dot(
        x_ref[...], w_ref[...], preferred_element_type=jnp.float32
    ).astype(s_ref.dtype)


def _aggregate_kernel(adj_ref, s_ref, out_ref, acc_ref):
    # grid = (row tiles i, contraction tiles k); output block fixed across k.
    k = pl.program_id(1)

    @pl.when(k == 0)
    def _():
        acc_ref[...] = jnp.zeros_like(acc_ref)

    acc_ref[...] += jnp.dot(
        adj_ref[...], s_ref[...], preferred_element_type=jnp.float32
    )

    @pl.when(k == pl.num_programs(1) - 1)
    def _():
        out_ref[...] = jnp.maximum(acc_ref[...], 0.0).astype(out_ref.dtype)


def graph_convolution(x, adj, weight, *, tile=256):
    """Pallas forward of GraphConvolution (act = relu, dropout = 0)."""
    N, f_in = x.shape
    f_out = weight.shape[1]
    assert adj.shape == (N, N)

    # ---- tiling / padding ---------------------------------------------------
    # adj tile is (tile, tile): sublane axis needs %8, lane axis %128.
    tile = min(tile, _round_up(N, 128))
    n_pad = _round_up(N, tile)          # pad N so both grid axes tile evenly
    f_pad = _round_up(f_out, 128)       # lane-dense output (unmasked vst)

    # Zero-pad the (tiny) weight; padded columns give relu(0) = 0, sliced off.
    w_p = (
        jnp.zeros((f_in, f_pad), jnp.float32)
        .at[:, :f_out]
        .set(weight.astype(jnp.float32))
    )

    # TODO(synk): F.dropout with p>0 (training mode) not implemented; the
    # module default p=0.0 is the identity.
    x_p = x.astype(jnp.float32)
    adj_p = adj.astype(jnp.bfloat16)
    if n_pad != N:
        # Zero rows/cols: padded adj columns hit zero support rows (=> +0),
        # padded output rows are sliced off below.
        x_p = jnp.pad(x_p, ((0, n_pad - N), (0, 0)))
        adj_p = jnp.pad(adj_p, ((0, n_pad - N), (0, n_pad - N)))

    n_row_tiles = n_pad // tile
    n_k_tiles = n_pad // tile

    # ---- step 1: support = x @ W  (cheap, hoisted out of the adj grid) ------
    support = pl.pallas_call(
        _support_kernel,
        out_shape=jax.ShapeDtypeStruct((n_pad, f_pad), jnp.bfloat16),
        grid_spec=pltpu.PrefetchScalarGridSpec(
            num_scalar_prefetch=0,
            grid=(n_row_tiles,),
            in_specs=[
                pl.BlockSpec((tile, f_in), lambda i: (i, 0)),
                pl.BlockSpec((f_in, f_pad), lambda i: (0, 0)),
            ],
            out_specs=pl.BlockSpec((tile, f_pad), lambda i: (i, 0)),
        ),
        compiler_params=pltpu.CompilerParams(
            dimension_semantics=("parallel",),
            vmem_limit_bytes=64 << 20,
        ),
    )(x_p, w_p)

    # ---- step 2: out = relu(adj @ support), K-tiled, bf16 streamed ----------
    cost = pl.CostEstimate(
        flops=2 * n_pad * n_pad * f_pad,
        transcendentals=0,
        bytes_accessed=(
            n_pad * n_pad * 2                       # adj (bf16)
            + n_row_tiles * n_pad * f_pad * 2       # support re-reads (bf16)
            + n_pad * f_pad * 4                     # output (f32)
        ),
    )
    out_padded = pl.pallas_call(
        _aggregate_kernel,
        out_shape=jax.ShapeDtypeStruct((n_pad, f_pad), jnp.float32),
        grid_spec=pltpu.PrefetchScalarGridSpec(
            num_scalar_prefetch=0,
            grid=(n_row_tiles, n_k_tiles),
            in_specs=[
                pl.BlockSpec((tile, tile), lambda i, k: (i, k)),
                pl.BlockSpec((tile, f_pad), lambda i, k: (k, 0)),
            ],
            out_specs=pl.BlockSpec((tile, f_pad), lambda i, k: (i, 0)),
            scratch_shapes=[pltpu.VMEM((tile, f_pad), jnp.float32)],
        ),
        compiler_params=pltpu.CompilerParams(
            # row axis independent -> shard across TCs (v7x megacore);
            # K axis is a reduction into the accumulator -> arbitrary.
            dimension_semantics=("parallel", "arbitrary"),
            vmem_limit_bytes=64 << 20,
        ),
        cost_estimate=cost,
    )(adj_p, support)

    # TODO(synk): blocked-sparse tile skipping (scalar-prefetched nonzero
    # flags for torch.spmm-style sparsity) not implemented; kernel is dense.
    return out_padded[:N, :f_out]


if __name__ == "__main__":
    # Small deterministic problem: 256 nodes, 64 -> 32 features.
    N, F_IN, F_OUT = 256, 64, 32
    key = jax.random.PRNGKey(0)
    kx, ka = jax.random.split(key)

    x = jax.random.normal(kx, (N, F_IN), dtype=jnp.float32)
    # sparse-ish dense "adjacency" (torch.spmm done densely here)
    adj_raw = jax.random.uniform(ka, (N, N), dtype=jnp.float32)
    adj = (adj_raw > 0.9).astype(jnp.float32) / 10.0

    # reset_parameters(): constant 0.3
    weight = jnp.full((F_IN, F_OUT), 0.3, dtype=jnp.float32)

    out = graph_convolution(x, adj, weight)
    out = jax.block_until_ready(out)

    # reference check (pure JAX, f32) -- kernel streams adj/support in bf16
    # with f32 accumulation, so use a correspondingly relaxed tolerance.
    ref = jnp.maximum(adj @ (x @ weight), 0.0)
    assert out.shape == (N, F_OUT)
    assert jnp.allclose(out, ref, atol=5e-2, rtol=5e-2), "mismatch vs reference"

    print("KERNEL_OK")
</pallas_src>

<mosaic_0001>
module attributes {stable_mosaic.version = 11 : i64} {
  func.func @_support_kernel(%arg0: i32, %arg1: memref<256x64xf32, #tpu.memory_space<vmem>>, %arg2: memref<64x128xf32, #tpu.memory_space<vmem>>, %arg3: memref<256x128xbf16, #tpu.memory_space<vmem>>) attributes {dimension_semantics = [#tpu.dimension_semantics<parallel>], iteration_bounds = array<i64: 1>, scalar_prefetch = 0 : i64, scratch_operands = 0 : i64, tpu.core_type = #tpu.core_type<tc>, window_params = [{transform_indices = @transform_0, window_bounds = array<i64: 256, 64>}, {pipeline_mode = #tpu.pipeline_mode<synchronous>, transform_indices = @transform_1, window_bounds = array<i64: 64, 128>}, {transform_indices = @transform_2, window_bounds = array<i64: 256, 128>}]} {
    %c0 = arith.constant 0 : index
    %c0_0 = arith.constant 0 : index
    %0 = vector.load %arg1[%c0, %c0_0] : memref<256x64xf32, #tpu.memory_space<vmem>>, vector<256x64xf32>
    %c0_1 = arith.constant 0 : index
    %c0_2 = arith.constant 0 : index
    %1 = vector.load %arg2[%c0_1, %c0_2] : memref<64x128xf32, #tpu.memory_space<vmem>>, vector<64x128xf32>
    %cst = arith.constant dense<0.000000e+00> : vector<256x128xf32>
    %2 = tpu.matmul %0, %1, %cst {dimension_numbers = #tpu.dot_dimension_numbers<[1], [0], [0], [1], [0, 0, 1, 1], [], []>} : vector<256x64xf32>, vector<64x128xf32>, vector<256x128xf32> -> vector<256x128xf32>
    %3 = arith.truncf %2 : vector<256x128xf32> to vector<256x128xbf16>
    %c0_3 = arith.constant 0 : index
    %c0_4 = arith.constant 0 : index
    %4 = vector.load %arg3[%c0_3, %c0_4] : memref<256x128xbf16, #tpu.memory_space<vmem>>, vector<256x128xbf16>
    tpu.vector_store %arg3[%c0_3, %c0_4], %3 {strides = array<i32>} : memref<256x128xbf16, #tpu.memory_space<vmem>>, vector<256x128xbf16>,
    return
  }
  func.func @transform_0(%arg0: i32) -> (i32, i32) {
    %c0_i32 = arith.constant 0 : i32
    %c0_i32_0 = arith.constant 0 : i32
    return %arg0, %c0_i32 : i32, i32
  }
  func.func @transform_1(%arg0: i32) -> (i32, i32) {
    %c0_i32 = arith.constant 0 : i32
    %c0_i32_0 = arith.constant 0 : i32
    %c0_i32_1 = arith.constant 0 : i32
    return %c0_i32, %c0_i32_0 : i32, i32
  }
  func.func @transform_2(%arg0: i32) -> (i32, i32) {
    %c0_i32 = arith.constant 0 : i32
    %c0_i32_0 = arith.constant 0 : i32
    return %arg0, %c0_i32 : i32, i32
  }
}

</mosaic_0001>

<llo_original>
// kernel: tpu_custom_call.1
$region0: #{tpu_custom_call.1}
  #allocation0 [shape = 'u32[]', space=smem, size = 0x4, offset = 0x4, fixed_abs, tag = 'smem constant byte address 0x4 - core index']
  #allocation1 [shape = 'u32[144,128]{1,0:T(1,128)}', space=vmem, size = 0x12000, scoped, tag = 'internal scratch']
  %s0 = inlined_call_operand.vmem [shape: f32[256,64], index: 0, kind: input, shape index: {}]
  %s1 = inlined_call_operand.vmem [shape: f32[64,128], index: 1, kind: input, shape index: {}]
  %s2 = inlined_call_operand.hbm [shape: bf16[256,128], index: 2, kind: output, shape index: {}]
  %s3 = sld [smem:[#allocation0]]
  $region18: #{tpu_custom_call.1} parent=0
    _
  %s5 = ssub.s32 1, %s3
  %s6 = scalar_select 0, %s5, %s3
  $region1: #{tpu_custom_call.1} parent=0
    #allocation2 [shape = 'u8[65536]{0}', space=vmem, size = 0x10000, scoped, tag = 'output window, operand 0, single buffered']
    #allocation3 [shape = 's32[1]{0}', space=sflag, size = 0x4, scoped, tag = 'scoped memory for tpu_custom_call.1']
    %7 = vsyncpa [#allocation3], 0
    // Predicated region
    $region2: #{tpu_custom_call.1} parent=1 // pred_check
      _
    $region3: #{tpu_custom_call.1} parent=1 // pred_check_branch
      %9 = sbr.rel (0) target = $region5
    $region4: #{tpu_custom_call.1} parent=1 // pred_region
      _
    $region5: #{tpu_custom_call.1} parent=1 // pred_fallthru
      _
    // Predicated region
    $region6: #{tpu_custom_call.1} parent=1 // pred_check
      _
    $region7: #{tpu_custom_call.1} parent=1 // pred_check_branch
      %11 = sbr.rel (0) target = $region9
    $region8: #{tpu_custom_call.1} parent=1 // pred_region
      _
    $region9: #{tpu_custom_call.1} parent=1 // pred_fallthru
      _
    %v12 = vld [vmem:[%s0] sm:$0xff]
    %v13 = vld [vmem:[%s0 + $0x8] sm:$0xff]
    %v14 = vld [vmem:[%s0 + $0x10] sm:$0xff]
    %v15 = vld [vmem:[%s0 + $0x18] sm:$0xff]
    %v16 = vld [vmem:[%s0 + $0x20] sm:$0xff]
    %v17 = vld [vmem:[%s0 + $0x28] sm:$0xff]
    %v18 = vld [vmem:[%s0 + $0x30] sm:$0xff]
    %v19 = vld [vmem:[%s0 + $0x38] sm:$0xff]
    %v20 = vld [vmem:[%s0 + $0x40] sm:$0xff]
    %v21 = vld [vmem:[%s0 + $0x48] sm:$0xff]
    %v22 = vld [vmem:[%s0 + $0x50] sm:$0xff]
    %v23 = vld [vmem:[%s0 + $0x58] sm:$0xff]
    %v24 = vld [vmem:[%s0 + $0x60] sm:$0xff]
    %v25 = vld [vmem:[%s0 + $0x68] sm:$0xff]
    %v26 = vld [vmem:[%s0 + $0x70] sm:$0xff]
    %v27 = vld [vmem:[%s0 + $0x78] sm:$0xff]
    %v28 = vld [vmem:[%s0 + $0x80] sm:$0xff]
    %v29 = vld [vmem:[%s0 + $0x88] sm:$0xff]
    %v30 = vld [vmem:[%s0 + $0x90] sm:$0xff]
    %v31 = vld [vmem:[%s0 + $0x98] sm:$0xff]
    %v32 = vld [vmem:[%s0 + $0xa0] sm:$0xff]
    %v33 = vld [vmem:[%s0 + $0xa8] sm:$0xff]
    %v34 = vld [vmem:[%s0 + $0xb0] sm:$0xff]
    %v35 = vld [vmem:[%s0 + $0xb8] sm:$0xff]
    %v36 = vld [vmem:[%s0 + $0xc0] sm:$0xff]
    %v37 = vld [vmem:[%s0 + $0xc8] sm:$0xff]
    %v38 = vld [vmem:[%s0 + $0xd0] sm:$0xff]
    %v39 = vld [vmem:[%s0 + $0xd8] sm:$0xff]
    %v40 = vld [vmem:[%s0 + $0xe0] sm:$0xff]
    %v41 = vld [vmem:[%s0 + $0xe8] sm:$0xff]
    %v42 = vld [vmem:[%s0 + $0xf0] sm:$0xff]
    %v43 = vld [vmem:[%s0 + $0xf8] sm:$0xff]
    %v44 = vld [vmem:[%s1] sm:$0xff]
    %v45 = vld [vmem:[%s1 + $0x8] sm:$0xff]
    %v46 = vld [vmem:[%s1 + $0x10] sm:$0xff]
    %v47 = vld [vmem:[%s1 + $0x18] sm:$0xff]
    %v48 = vld [vmem:[%s1 + $0x20] sm:$0xff]
    %v49 = vld [vmem:[%s1 + $0x28] sm:$0xff]
    %v50 = vld [vmem:[%s1 + $0x30] sm:$0xff]
    %v51 = vld [vmem:[%s1 + $0x38] sm:$0xff]
    %vm52 = vcmask 523264
    %v54 = vsel %vm52, %v12, 0
    %v57 = vsel %vm52, %v13, 0
    %v60 = vsel %vm52, %v14, 0
    %v63 = vsel %vm52, %v15, 0
    %v66 = vsel %vm52, %v16, 0
    %v69 = vsel %vm52, %v17, 0
    %v72 = vsel %vm52, %v18, 0
    %v75 = vsel %vm52, %v19, 0
    %v78 = vsel %vm52, %v20, 0
    %v81 = vsel %vm52, %v21, 0
    %v84 = vsel %vm52, %v22, 0
    %v87 = vsel %vm52, %v23, 0
    %v90 = vsel %vm52, %v24, 0
    %v93 = vsel %vm52, %v25, 0
    %v96 = vsel %vm52, %v26, 0
    %v99 = vsel %vm52, %v27, 0
    %v102 = vsel %vm52, %v28, 0
    %v105 = vsel %vm52, %v29, 0
    %v108 = vsel %vm52, %v30, 0
    %v111 = vsel %vm52, %v31, 0
    %v114 = vsel %vm52, %v32, 0
    %v117 = vsel %vm52, %v33, 0
    %v120 = vsel %vm52, %v34, 0
    %v123 = vsel %vm52, %v35, 0
    %v126 = vsel %vm52, %v36, 0
    %v129 = vsel %vm52, %v37, 0
    %v132 = vsel %vm52, %v38, 0
    %v135 = vsel %vm52, %v39, 0
    %v138 = vsel %vm52, %v40, 0
    %v141 = vsel %vm52, %v41, 0
    %v144 = vsel %vm52, %v42, 0
    %v147 = vsel %vm52, %v43, 0
    %149 = vmatprep.subr.mxu0 0.0
    %150 = vmatpush1.msra.mxu0 0.0
    %151 = vmatprep.subr.mxu0 0.0
    %152 = vmatpush1.msra.mxu0 0.0
    %153 = vmatprep.subr.mxu0 0.0
    %154 = vmatpush1.msra.mxu0 0.0
    %155 = vmatprep.subr.mxu0 0.0
    %156 = vmatpush1.msra.mxu0 0.0
    %157 = vmatprep.subr.mxu0 0.0
    %158 = vmatpush1.msra.mxu0 0.0
    %159 = vmatprep.subr.mxu0 0.0
    %160 = vmatpush1.msra.mxu0 0.0
    %161 = vmatprep.subr.mxu0 0.0
    %162 = vmatpush1.msra.mxu0 0.0
    %163 = vmatprep.subr.mxu0 0.0
    %164 = vmatpush1.msra.mxu0 0.0
    %165 = vmatprep.subr.mxu0 0.0
    %166 = vmatpush1.msra.mxu0 %v51
    %167 = vmatprep.subr.mxu0 0.0
    %168 = vmatpush1.msra.mxu0 %v50
    %169 = vmatprep.subr.mxu0 0.0
    %170 = vmatpush1.msra.mxu0 %v49
    %171 = vmatprep.subr.mxu0 0.0
    %172 = vmatpush1.msra.mxu0 %v48
    %173 = vmatprep.subr.mxu0 0.0
    %174 = vmatpush1.msra.mxu0 %v47
    %175 = vmatprep.subr.mxu0 0.0
    %176 = vmatpush1.msra.mxu0 %v46
    %177 = vmatprep.subr.mxu0 0.0
    %178 = vmatpush1.msra.mxu0 %v45
    %179 = vmatprep.subr.mxu0 0.0
    %180 = vmatpush1.msra.mxu0 %v44
    %181 = vmatprep.subr.mxu0 0.0
    %182 = vmatpush2.msra.mxu0 0.0
    %183 = vmatprep.subr.mxu0 0.0
    %184 = vmatpush2.msra.mxu0 0.0
    %185 = vmatprep.subr.mxu0 0.0
    %186 = vmatpush2.msra.mxu0 0.0
    %187 = vmatprep.subr.mxu0 0.0
    %188 = vmatpush2.msra.mxu0 0.0
    %189 = vmatprep.subr.mxu0 0.0
    %190 = vmatpush2.msra.mxu0 0.0
    %191 = vmatprep.subr.mxu0 0.0
    %192 = vmatpush2.msra.mxu0 0.0
    %193 = vmatprep.subr.mxu0 0.0
    %194 = vmatpush2.msra.mxu0 0.0
    %195 = vmatprep.subr.mxu0 0.0
    %196 = vmatpush2.msra.mxu0 0.0
    %197 = vmatprep.subr.mxu0 0.0
    %198 = vmatpush2.msra.mxu0 0.0
    %199 = vmatprep.subr.mxu0 0.0
    %200 = vmatpush2.msra.mxu0 0.0
    %201 = vmatprep.subr.mxu0 0.0
    %202 = vmatpush2.msra.mxu0 0.0
    %203 = vmatprep.subr.mxu0 0.0
    %204 = vmatpush2.msra.mxu0 0.0
    %205 = vmatprep.subr.mxu0 0.0
    %206 = vmatpush2.msra.mxu0 0.0
    %207 = vmatprep.subr.mxu0 0.0
    %208 = vmatpush2.msra.mxu0 0.0
    %209 = vmatprep.subr.mxu0 0.0
    %210 = vmatpush2.msra.mxu0 0.0
    %211 = vmatprep.subr.mxu0 0.0
    %212 = vmatpush2.msra.mxu0 0.0
    %213 = vmatprep.mubr.f32.mxu0 0.0
    %214 = vmatmul.mubr.f32.gmra.mxu0 %v54
    %v215 = vpop.f32.mrf.mxu0
    %v216 = vadd.f32 0.0, %v215
    %v217 = vpop.f32.mrf.mxu0
    %218 = vmatprep.mubr.f32.mxu0 0.0
    %219 = vmatmul.mubr.f32.gmra.mxu0 %v57
    %v220 = vpop.f32.mrf.mxu0
    %v221 = vadd.f32 0.0, %v220
    %v222 = vpop.f32.mrf.mxu0
    %223 = vmatprep.mubr.f32.mxu0 0.0
    %224 = vmatmul.mubr.f32.gmra.mxu0 %v60
    %v225 = vpop.f32.mrf.mxu0
    %v226 = vadd.f32 0.0, %v225
    %v227 = vpop.f32.mrf.mxu0
    %228 = vmatprep.mubr.f32.mxu0 0.0
    %229 = vmatmul.mubr.f32.gmra.mxu0 %v63
    %v230 = vpop.f32.mrf.mxu0
    %v231 = vadd.f32 0.0, %v230
    %v232 = vpop.f32.mrf.mxu0
    %233 = vmatprep.mubr.f32.mxu0 0.0
    %234 = vmatmul.mubr.f32.gmra.mxu0 %v66
    %v235 = vpop.f32.mrf.mxu0
    %v236 = vadd.f32 0.0, %v235
    %v237 = vpop.f32.mrf.mxu0
    %238 = vmatprep.mubr.f32.mxu0 0.0
    %239 = vmatmul.mubr.f32.gmra.mxu0 %v69
    %v240 = vpop.f32.mrf.mxu0
    %v241 = vadd.f32 0.0, %v240
    %v242 = vpop.f32.mrf.mxu0
    %243 = vmatprep.mubr.f32.mxu0 0.0
    %244 = vmatmul.mubr.f32.gmra.mxu0 %v72
    %v245 = vpop.f32.mrf.mxu0
    %v246 = vadd.f32 0.0, %v245
    %v247 = vpop.f32.mrf.mxu0
    %248 = vmatprep.mubr.f32.mxu0 0.0
    %249 = vmatmul.mubr.f32.gmra.mxu0 %v75
    %v250 = vpop.f32.mrf.mxu0
    %v251 = vadd.f32 0.0, %v250
    %v252 = vpop.f32.mrf.mxu0
    %253 = vmatprep.mubr.f32.mxu0 0.0
    %254 = vmatmul.mubr.f32.gmra.mxu0 %v78
    %v255 = vpop.f32.mrf.mxu0
    %v256 = vadd.f32 0.0, %v255
    %v257 = vpop.f32.mrf.mxu0
    %258 = vmatprep.mubr.f32.mxu0 0.0
    %259 = vmatmul.mubr.f32.gmra.mxu0 %v81
    %v260 = vpop.f32.mrf.mxu0
    %v261 = vadd.f32 0.0, %v260
    %v262 = vpop.f32.mrf.mxu0
    %263 = vmatprep.mubr.f32.mxu0 0.0
    %264 = vmatmul.mubr.f32.gmra.mxu0 %v84
    %v265 = vpop.f32.mrf.mxu0
    %v266 = vadd.f32 0.0, %v265
    %v267 = vpop.f32.mrf.mxu0
    %268 = vmatprep.mubr.f32.mxu0 0.0
    %269 = vmatmul.mubr.f32.gmra.mxu0 %v87
    %v270 = vpop.f32.mrf.mxu0
    %v271 = vadd.f32 0.0, %v270
    %v272 = vpop.f32.mrf.mxu0
    %273 = vmatprep.mubr.f32.mxu0 0.0
    %274 = vmatmul.mubr.f32.gmra.mxu0 %v90
    %v275 = vpop.f32.mrf.mxu0
    %v276 = vadd.f32 0.0, %v275
    %v277 = vpop.f32.mrf.mxu0
    %278 = vmatprep.mubr.f32.mxu0 0.0
    %279 = vmatmul.mubr.f32.gmra.mxu0 %v93
    %v280 = vpop.f32.mrf.mxu0
    %v281 = vadd.f32 0.0, %v280
    %v282 = vpop.f32.mrf.mxu0
    %283 = vmatprep.mubr.f32.mxu0 0.0
    %284 = vmatmul.mubr.f32.gmra.mxu0 %v96
    %v285 = vpop.f32.mrf.mxu0
    %v286 = vadd.f32 0.0, %v285
    %v287 = vpop.f32.mrf.mxu0
    %288 = vmatprep.mubr.f32.mxu0 0.0
    %289 = vmatmul.mubr.f32.gmra.mxu0 %v99
    %v290 = vpop.f32.mrf.mxu0
    %v291 = vadd.f32 0.0, %v290
    %v292 = vpop.f32.mrf.mxu0
    %293 = vmatprep.mubr.f32.mxu0 0.0
    %294 = vmatmul.mubr.f32.gmra.mxu0 %v102
    %v295 = vpop.f32.mrf.mxu0
    %v296 = vadd.f32 0.0, %v295
    %v297 = vpop.f32.mrf.mxu0
    %298 = vmatprep.mubr.f32.mxu0 0.0
    %299 = vmatmul.mubr.f32.gmra.mxu0 %v105
    %v300 = vpop.f32.mrf.mxu0
    %v301 = vadd.f32 0.0, %v300
    %v302 = vpop.f32.mrf.mxu0
    %303 = vmatprep.mubr.f32.mxu0 0.0
    %304 = vmatmul.mubr.f32.gmra.mxu0 %v108
    %v305 = vpop.f32.mrf.mxu0
    %v306 = vadd.f32 0.0, %v305
    %v307 = vpop.f32.mrf.mxu0
    %308 = vmatprep.mubr.f32.mxu0 0.0
    %309 = vmatmul.mubr.f32.gmra.mxu0 %v111
    %v310 = vpop.f32.mrf.mxu0
    %v311 = vadd.f32 0.0, %v310
    %v312 = vpop.f32.mrf.mxu0
    %313 = vmatprep.mubr.f32.mxu0 0.0
    %314 = vmatmul.mubr.f32.gmra.mxu0 %v114
    %v315 = vpop.f32.mrf.mxu0
    %v316 = vadd.f32 0.0, %v315
    %v317 = vpop.f32.mrf.mxu0
    %318 = vmatprep.mubr.f32.mxu0 0.0
    %319 = vmatmul.mubr.f32.gmra.mxu0 %v117
    %v320 = vpop.f32.mrf.mxu0
    %v321 = vadd.f32 0.0, %v320
    %v322 = vpop.f32.mrf.mxu0
    %323 = vmatprep.mubr.f32.mxu0 0.0
    %324 = vmatmul.mubr.f32.gmra.mxu0 %v120
    %v325 = vpop.f32.mrf.mxu0
    %v326 = vadd.f32 0.0, %v325
    %v327 = vpop.f32.mrf.mxu0
    %328 = vmatprep.mubr.f32.mxu0 0.0
    %329 = vmatmul.mubr.f32.gmra.mxu0 %v123
    %v330 = vpop.f32.mrf.mxu0
    %v331 = vadd.f32 0.0, %v330
    %v332 = vpop.f32.mrf.mxu0
    %333 = vmatprep.mubr.f32.mxu0 0.0
    %334 = vmatmul.mubr.f32.gmra.mxu0 %v126
    %v335 = vpop.f32.mrf.mxu0
    %v336 = vadd.f32 0.0, %v335
    %v337 = vpop.f32.mrf.mxu0
    %338 = vmatprep.mubr.f32.mxu0 0.0
    %339 = vmatmul.mubr.f32.gmra.mxu0 %v129
    %v340 = vpop.f32.mrf.mxu0
    %v341 = vadd.f32 0.0, %v340
    %v342 = vpop.f32.mrf.mxu0
    %343 = vmatprep.mubr.f32.mxu0 0.0
    %344 = vmatmul.mubr.f32.gmra.mxu0 %v132
    %v345 = vpop.f32.mrf.mxu0
    %v346 = vadd.f32 0.0, %v345
    %v347 = vpop.f32.mrf.mxu0
    %348 = vmatprep.mubr.f32.mxu0 0.0
    %349 = vmatmul.mubr.f32.gmra.mxu0 %v135
    %v350 = vpop.f32.mrf.mxu0
    %v351 = vadd.f32 0.0, %v350
    %v352 = vpop.f32.mrf.mxu0
    %353 = vmatprep.mubr.f32.mxu0 0.0
    %354 = vmatmul.mubr.f32.gmra.mxu0 %v138
    %v355 = vpop.f32.mrf.mxu0
    %v356 = vadd.f32 0.0, %v355
    %v357 = vpop.f32.mrf.mxu0
    %358 = vmatprep.mubr.f32.mxu0 0.0
    %359 = vmatmul.mubr.f32.gmra.mxu0 %v141
    %v360 = vpop.f32.mrf.mxu0
    %v361 = vadd.f32 0.0, %v360
    %v362 = vpop.f32.mrf.mxu0
    %363 = vmatprep.mubr.f32.mxu0 0.0
    %364 = vmatmul.mubr.f32.gmra.mxu0 %v144
    %v365 = vpop.f32.mrf.mxu0
    %v366 = vadd.f32 0.0, %v365
    %v367 = vpop.f32.mrf.mxu0
    %368 = vmatprep.mubr.f32.mxu0 0.0
    %369 = vmatmul.mubr.f32.gmra.mxu0 %v147
    %v370 = vpop.f32.mrf.mxu0
    %v371 = vadd.f32 0.0, %v370
    %v372 = vpop.f32.mrf.mxu0
    %373 = vdwg.mxu0
    %v374 = vpack.c.bf16 %v221, %v216
    %v375 = vpack.c.bf16 %v231, %v226
    %v376 = vpack.c.bf16 %v241, %v236
    %v377 = vpack.c.bf16 %v251, %v246
    %v378 = vpack.c.bf16 %v261, %v256
    %v379 = vpack.c.bf16 %v271, %v266
    %v380 = vpack.c.bf16 %v281, %v276
    %v381 = vpack.c.bf16 %v291, %v286
    %v382 = vpack.c.bf16 %v301, %v296
    %v383 = vpack.c.bf16 %v311, %v306
    %v384 = vpack.c.bf16 %v321, %v316
    %v385 = vpack.c.bf16 %v331, %v326
    %v386 = vpack.c.bf16 %v341, %v336
    %v387 = vpack.c.bf16 %v351, %v346
    %v388 = vpack.c.bf16 %v361, %v356
    %v389 = vpack.c.bf16 %v371, %v366
    %v406 = vunpack.c.l.b16 %v374
    %v407 = vunpack.c.h.b16 %v374
    %v408 = vunpack.c.l.b16 %v375
    %v409 = vunpack.c.h.b16 %v375
    %v410 = vunpack.c.l.b16 %v376
    %v411 = vunpack.c.h.b16 %v376
    %v412 = vunpack.c.l.b16 %v377
    %v413 = vunpack.c.h.b16 %v377
    %v414 = vunpack.c.l.b16 %v378
    %v415 = vunpack.c.h.b16 %v378
    %v416 = vunpack.c.l.b16 %v379
    %v417 = vunpack.c.h.b16 %v379
    %v418 = vunpack.c.l.b16 %v380
    %v419 = vunpack.c.h.b16 %v380
    %v420 = vunpack.c.l.b16 %v381
    %v421 = vunpack.c.h.b16 %v381
    %v422 = vunpack.c.l.b16 %v382
    %v423 = vunpack.c.h.b16 %v382
    %v424 = vunpack.c.l.b16 %v383
    %v425 = vunpack.c.h.b16 %v383
    %v426 = vunpack.c.l.b16 %v384
    %v427 = vunpack.c.h.b16 %v384
    %v428 = vunpack.c.l.b16 %v385
    %v429 = vunpack.c.h.b16 %v385
    %v430 = vunpack.c.l.b16 %v386
    %v431 = vunpack.c.h.b16 %v386
    %v432 = vunpack.c.l.b16 %v387
    %v433 = vunpack.c.h.b16 %v387
    %v434 = vunpack.c.l.b16 %v388
    %v435 = vunpack.c.h.b16 %v388
    %v436 = vunpack.c.l.b16 %v389
    %v437 = vunpack.c.h.b16 %v389
    %v438 = vpack.c.b16 %v406, %v406
    %v439 = vpack.c.b16 %v407, %v407
    %v440 = vpack.c.b16 %v408, %v408
    %v441 = vpack.c.b16 %v409, %v409
    %v442 = vpack.c.b16 %v410, %v410
    %v443 = vpack.c.b16 %v411, %v411
    %v444 = vpack.c.b16 %v412, %v412
    %v445 = vpack.c.b16 %v413, %v413
    %v446 = vpack.c.b16 %v414, %v414
    %v447 = vpack.c.b16 %v415, %v415
    %v448 = vpack.c.b16 %v416, %v416
    %v449 = vpack.c.b16 %v417, %v417
    %v450 = vpack.c.b16 %v418, %v418
    %v451 = vpack.c.b16 %v419, %v419
    %v452 = vpack.c.b16 %v420, %v420
    %v453 = vpack.c.b16 %v421, %v421
    %v454 = vpack.c.b16 %v422, %v422
    %v455 = vpack.c.b16 %v423, %v423
    %v456 = vpack.c.b16 %v424, %v424
    %v457 = vpack.c.b16 %v425, %v425
    %v458 = vpack.c.b16 %v426, %v426
    %v459 = vpack.c.b16 %v427, %v427
    %v460 = vpack.c.b16 %v428, %v428
    %v461 = vpack.c.b16 %v429, %v429
    %v462 = vpack.c.b16 %v430, %v430
    %v463 = vpack.c.b16 %v431, %v431
    %v464 = vpack.c.b16 %v432, %v432
    %v465 = vpack.c.b16 %v433, %v433
    %v466 = vpack.c.b16 %v434, %v434
    %v467 = vpack.c.b16 %v435, %v435
    %v468 = vpack.c.b16 %v436, %v436
    %v469 = vpack.c.b16 %v437, %v437
    %502 = vst [vmem:[#allocation2] sm:$0xf] %v438
    %503 = vst [vmem:[#allocation2 + $0x4] sm:$0xf] %v439
    %504 = vst [vmem:[#allocation2 + $0x8] sm:$0xf] %v440
    %505 = vst [vmem:[#allocation2 + $0xc] sm:$0xf] %v441
    %506 = vst [vmem:[#allocation2 + $0x10] sm:$0xf] %v442
    %507 = vst [vmem:[#allocation2 + $0x14] sm:$0xf] %v443
    %508 = vst [vmem:[#allocation2 + $0x18] sm:$0xf] %v444
    %509 = vst [vmem:[#allocation2 + $0x1c] sm:$0xf] %v445
    %510 = vst [vmem:[#allocation2 + $0x20] sm:$0xf] %v446
    %511 = vst [vmem:[#allocation2 + $0x24] sm:$0xf] %v447
    %512 = vst [vmem:[#allocation2 + $0x28] sm:$0xf] %v448
    %513 = vst [vmem:[#allocation2 + $0x2c] sm:$0xf] %v449
    %514 = vst [vmem:[#allocation2 + $0x30] sm:$0xf] %v450
    %515 = vst [vmem:[#allocation2 + $0x34] sm:$0xf] %v451
    %516 = vst [vmem:[#allocation2 + $0x38] sm:$0xf] %v452
    %517 = vst [vmem:[#allocation2 + $0x3c] sm:$0xf] %v453
    %518 = vst [vmem:[#allocation2 + $0x40] sm:$0xf] %v454
    %519 = vst [vmem:[#allocation2 + $0x44] sm:$0xf] %v455
    %520 = vst [vmem:[#allocation2 + $0x48] sm:$0xf] %v456
    %521 = vst [vmem:[#allocation2 + $0x4c] sm:$0xf] %v457
    %522 = vst [vmem:[#allocation2 + $0x50] sm:$0xf] %v458
    %523 = vst [vmem:[#allocation2 + $0x54] sm:$0xf] %v459
    %524 = vst [vmem:[#allocation2 + $0x58] sm:$0xf] %v460
    %525 = vst [vmem:[#allocation2 + $0x5c] sm:$0xf] %v461
    %526 = vst [vmem:[#allocation2 + $0x60] sm:$0xf] %v462
    %527 = vst [vmem:[#allocation2 + $0x64] sm:$0xf] %v463
    %528 = vst [vmem:[#allocation2 + $0x68] sm:$0xf] %v464
    %529 = vst [vmem:[#allocation2 + $0x6c] sm:$0xf] %v465
    %530 = vst [vmem:[#allocation2 + $0x70] sm:$0xf] %v466
    %531 = vst [vmem:[#allocation2 + $0x74] sm:$0xf] %v467
    %532 = vst [vmem:[#allocation2 + $0x78] sm:$0xf] %v468
    %533 = vst [vmem:[#allocation2 + $0x7c] sm:$0xf] %v469
    // Predicated region
    $region10: #{tpu_custom_call.1} parent=1 // pred_check
      _
    $region11: #{tpu_custom_call.1} parent=1 // pred_check_branch
      %535 = sbr.rel (0) target = $region13
    $region12: #{tpu_custom_call.1} parent=1 // pred_region
      %s537 = ssub.s32 2048, 2048
      %538 = vsyncadd [#allocation3], %s537
      %s539 = sshll.u32 [#allocation2], 4
      %s540 = int_to_ptr.vmem [resolvable:$true] %s539
      %545 = dma.vmem_to_hbm [thread:$0]  %s540, 2048, %s2, [#allocation3], 64, 64, 4
    $region13: #{tpu_custom_call.1} parent=1 // pred_fallthru
      _
    // Predicated region
    $region14: #{tpu_custom_call.1} parent=1 // pred_check
      _
    $region15: #{tpu_custom_call.1} parent=1 // pred_check_branch
      %547 = sbr.rel (0) target = $region17
    $region16: #{tpu_custom_call.1} parent=1 // pred_region
      %548 = dma.done [#allocation3], 2048
    $region17: #{tpu_custom_call.1} parent=1 // pred_fallthru
      _
    %549 = vsyncpa [#allocation3], 1

</llo_original>
